<compile_context>
chip_gen: v7x
topology: tpu7x:2x2x1
jax: 0.10.0
libtpu: 0.0.40
codegen_flags: <defaults>
</compile_context>

<pallas_src>
import functools

import jax
import jax.numpy as jnp
from jax.experimental import pallas as pl
from jax.experimental.pallas import tpu as pltpu


D_PAD = 128   # lane-dense feature width used inside the fused kernel
B_PAD = 8     # sublane-dense graph (row) count for the output slab


def _vmem_spec():
    return pl.BlockSpec(memory_space=pltpu.MemorySpace.VMEM)


# ----------------------------------------------------------------------------
# Single fused Pallas kernel: whole forward pass, everything VMEM-resident.
# ----------------------------------------------------------------------------

def _net_fused_kernel(a_ref, x_ref, pool_ref, convw_ref, mlpw_ref, bias_ref,
                      out_ref):
    f32 = jnp.float32
    bf16 = jnp.bfloat16

    a = a_ref[...]                        # (N, N) bf16 A_hat, loaded once
    x = x_ref[...].astype(bf16)           # (N, 128) node features (zero-padded)

    # --- conv_first: relu(A_hat @ (X @ W0) + b0) --- (bf16 MXU feeds, f32 acc)
    h = jnp.dot(x, convw_ref[0], preferred_element_type=f32)
    h = jnp.dot(a, h.astype(bf16), preferred_element_type=f32) + bias_ref[0:1, :]
    h = jnp.maximum(h, 0.0)
    jkn = h  # running JumpingKnowledge('max'), kept in f32

    # --- conv layer 1 (relu) ---
    h = jnp.dot(h.astype(bf16), convw_ref[1], preferred_element_type=f32)
    h = jnp.dot(a, h.astype(bf16), preferred_element_type=f32) + bias_ref[1:2, :]
    h = jnp.maximum(h, 0.0)
    jkn = jnp.maximum(jkn, h)

    # --- conv layer 2 (last conv layer: no activation) ---
    h = jnp.dot(h.astype(bf16), convw_ref[2], preferred_element_type=f32)
    h = jnp.dot(a, h.astype(bf16), preferred_element_type=f32) + bias_ref[2:3, :]
    jkn = jnp.maximum(jkn, h)

    # --- global_add_pool, computed once (emb_T == diff_embed1 == diff_embed2) ---
    pooled = jnp.dot(pool_ref[...], jkn, preferred_element_type=f32)  # (B_PAD,128)
    out_ref[:, 0:D_PAD] = pooled          # lane/sublane-dense store

    # --- fused MLP head: D -> 32 -> 16 -> 8 -> 1 (relu on hidden; tiny, f32) ---
    z = jnp.maximum(
        jnp.dot(pooled, mlpw_ref[0], preferred_element_type=f32) + bias_ref[3:4, :], 0.0)
    z = jnp.maximum(
        jnp.dot(z, mlpw_ref[1], preferred_element_type=f32) + bias_ref[4:5, :], 0.0)
    z = jnp.maximum(
        jnp.dot(z, mlpw_ref[2], preferred_element_type=f32) + bias_ref[5:6, :], 0.0)
    out_ref[:, D_PAD:2 * D_PAD] = (
        jnp.dot(z, mlpw_ref[3], preferred_element_type=f32) + bias_ref[6:7, :])


def _fused_forward_call(packed_params, x_pad, a_hat_bf16, pool_mat_pad):
    conv_w, mlp_w, biases = packed_params
    inputs = (a_hat_bf16, x_pad, pool_mat_pad, conv_w, mlp_w, biases)

    out_bytes = B_PAD * 2 * D_PAD * 4
    in_bytes = sum(int(t.size) * t.dtype.itemsize for t in inputs)
    # Sized to the actual buffers with generous margin for compiler temporaries,
    # capped well inside every generation's scoped-VMEM default.
    vmem_limit = int(min(32 * 1024 * 1024,
                         max(8 * 1024 * 1024, 4 * (in_bytes + out_bytes))))

    n = a_hat_bf16.shape[0]
    flops = (3 * (2 * n * D_PAD * D_PAD + 2 * n * n * D_PAD)   # 3 GCN layers
             + 2 * B_PAD * n * D_PAD                           # pooling
             + 4 * 2 * B_PAD * D_PAD * D_PAD)                  # MLP head
    cost = pl.CostEstimate(flops=flops, transcendentals=0,
                           bytes_accessed=in_bytes + out_bytes)

    return pl.pallas_call(
        _net_fused_kernel,
        out_shape=jax.ShapeDtypeStruct((B_PAD, 2 * D_PAD), jnp.float32),
        in_specs=[_vmem_spec()] * len(inputs),
        out_specs=_vmem_spec(),
        compiler_params=pltpu.CompilerParams(vmem_limit_bytes=vmem_limit),
        cost_estimate=cost,
    )(*inputs)


# ----------------------------------------------------------------------------
# Parameter construction (deterministic, synthetic) + lane-dense packing
# ----------------------------------------------------------------------------

def glorot(key, shape):
    fan_in, fan_out = shape
    scale = jnp.sqrt(2.0 / (fan_in + fan_out))
    return scale * jax.random.normal(key, shape, dtype=jnp.float32)


def init_params(key, in_channels, D, mlp_hidden, mlp_out_dim, num_layers):
    keys = jax.random.split(key, 16)
    ki = iter(range(16))
    params = {}
    # conv_first: in_channels -> D
    params["conv_first"] = (glorot(keys[next(ki)], (in_channels, D)),
                            jnp.zeros((D,), jnp.float32))
    # conv_layers: (num_layers - 1) layers of D -> D
    params["conv_layers"] = [
        (glorot(keys[next(ki)], (D, D)), jnp.zeros((D,), jnp.float32))
        for _ in range(num_layers - 1)]
    # MLP head for target 'perf': D -> hidden... -> out_dim
    dims = [D] + list(mlp_hidden) + [mlp_out_dim]
    params["mlp_perf"] = [
        (glorot(keys[next(ki)], (a, b)), jnp.zeros((b,), jnp.float32))
        for a, b in zip(dims[:-1], dims[1:])]
    return params


def _pad2(w, rows, cols):
    out = jnp.zeros((rows, cols), jnp.float32)
    return out.at[:w.shape[0], :w.shape[1]].set(w)


def pack_params(params):
    """Pack 16 parameter tensors into 3 lane-dense arrays.

    Zero padding (in_channels -> 128, D 64 -> 128, MLP widths -> 128) is an
    exact no-op on the logical columns: padded weight rows/cols are zero, padded
    bias entries are zero, so padded activation columns stay exactly zero
    through conv / JKN-max / pool / relu-MLP, and the wrapper slices them off.
    Conv weights are stored bf16 (MXU-native feed, half the DMA); the tiny MLP
    head stays f32.
    """
    w0, b0 = params["conv_first"]
    (w1, b1), (w2, b2) = params["conv_layers"]
    mlps = params["mlp_perf"]
    assert len(mlps) == 4

    conv_w = jnp.stack([_pad2(w0, D_PAD, D_PAD),
                        _pad2(w1, D_PAD, D_PAD),
                        _pad2(w2, D_PAD, D_PAD)], axis=0).astype(jnp.bfloat16)
    mlp_w = jnp.stack([_pad2(w, D_PAD, D_PAD) for (w, _) in mlps], axis=0)

    biases = jnp.zeros((8, D_PAD), jnp.float32)
    biases = biases.at[0, :b0.shape[0]].set(b0)
    biases = biases.at[1, :b1.shape[0]].set(b1)
    biases = biases.at[2, :b2.shape[0]].set(b2)
    for i, (_, b) in enumerate(mlps):
        biases = biases.at[3 + i, :b.shape[0]].set(b)
    return conv_w, mlp_w, biases


# ----------------------------------------------------------------------------
# Forward pass wrapper (assembles the module's output tuple)
# ----------------------------------------------------------------------------

def net_forward(packed_params, D, out_dim, num_graphs, x_pad, a_hat_bf16,
                pool_mat_pad):
    out_slab = _fused_forward_call(packed_params, x_pad, a_hat_bf16, pool_mat_pad)

    out_g = out_slab[:num_graphs, :D]                       # global_add_pool(out, batch)
    perf = out_slab[:num_graphs, D_PAD:D_PAD + out_dim]     # MLP head output

    out_dict = {"emb_T": out_g, "perf": perf}
    diff_embed1 = out_g              # pragma_out == out  (pragma_as_MLP disabled)
    diff_embed2 = out_g              # kernel_out == out
    out_embed = out_g

    total_loss = jnp.float32(0.0)    # inference_mode=True
    loss_dict = {}
    gae_loss = jnp.float32(0.0)      # gae_T = gae_P = False

    return (out_dict, total_loss, loss_dict, gae_loss,
            diff_embed1, diff_embed2, out_embed)


# ----------------------------------------------------------------------------
# Pure-JAX reference (unpadded, f32) for correctness checking
# ----------------------------------------------------------------------------

def reference_forward(params, x, a_hat, pool_mat):
    w0, b0 = params["conv_first"]
    outs = []
    out = jnp.maximum(a_hat @ (x @ w0) + b0, 0.0)
    outs.append(out)
    n_conv = len(params["conv_layers"])
    for i, (w, b) in enumerate(params["conv_layers"]):
        out = a_hat @ (out @ w) + b
        if i != n_conv - 1:
            out = jnp.maximum(out, 0.0)
        outs.append(out)
    out = jnp.max(jnp.stack(outs, axis=0), axis=0)
    out_g = pool_mat @ out
    h = out_g
    n_mlp = len(params["mlp_perf"])
    for i, (w, b) in enumerate(params["mlp_perf"]):
        h = h @ w + b
        if i != n_mlp - 1:
            h = jnp.maximum(h, 0.0)
    return out_g, h


# ----------------------------------------------------------------------------
# Graph construction helpers (glue)
# ----------------------------------------------------------------------------

def build_normalized_adj(edge_index, num_nodes):
    # Dense A + I, then symmetric GCN normalization D^-1/2 (A+I) D^-1/2.
    src, dst = edge_index
    adj = jnp.zeros((num_nodes, num_nodes), jnp.float32)
    adj = adj.at[dst, src].set(1.0)  # message from src -> dst
    adj = adj + jnp.eye(num_nodes, dtype=jnp.float32)
    deg = jnp.sum(adj, axis=1)
    d_inv_sqrt = 1.0 / jnp.sqrt(jnp.maximum(deg, 1e-12))
    return d_inv_sqrt[:, None] * adj * d_inv_sqrt[None, :]


def build_pool_matrix(batch, num_graphs):
    # one-hot [B, N] matrix so that pool_mat @ X == global_add_pool(X, batch)
    return (jnp.arange(num_graphs)[:, None] == batch[None, :]).astype(jnp.float32)


# ----------------------------------------------------------------------------
# Main
# ----------------------------------------------------------------------------

if __name__ == "__main__":
    IN_CHANNELS = 32
    D = 64
    NUM_LAYERS = 3          # conv_first + 2 conv_layers
    MLP_HIDDEN = [D // 2, D // 4, D // 8]
    MLP_OUT_DIM = 1         # regression
    NUM_NODES = 16
    NUM_GRAPHS = 2

    key = jax.random.PRNGKey(0)
    k_x, k_p = jax.random.split(key)

    # Node features
    x = jax.random.normal(k_x, (NUM_NODES, IN_CHANNELS), dtype=jnp.float32)

    # Two disjoint ring graphs of 8 nodes each (directed both ways)
    def ring_edges(offset, n):
        s = jnp.arange(n) + offset
        d = (jnp.arange(n) + 1) % n + offset
        return jnp.concatenate([s, d]), jnp.concatenate([d, s])

    s0, d0 = ring_edges(0, 8)
    s1, d1 = ring_edges(8, 8)
    edge_index = jnp.stack([jnp.concatenate([s0, s1]),
                            jnp.concatenate([d0, d1])], axis=0)

    batch = jnp.concatenate([jnp.zeros(8, jnp.int32), jnp.ones(8, jnp.int32)])

    a_hat = build_normalized_adj(edge_index, NUM_NODES)
    pool_mat = build_pool_matrix(batch, NUM_GRAPHS)

    # Kernel-side layouts: bf16 A_hat, lane-padded X, sublane-padded pool matrix.
    a_hat_bf16 = a_hat.astype(jnp.bfloat16)
    x_pad = jnp.zeros((NUM_NODES, D_PAD), jnp.float32).at[:, :IN_CHANNELS].set(x)
    pool_mat_pad = jnp.zeros((B_PAD, NUM_NODES), jnp.float32).at[:NUM_GRAPHS, :].set(pool_mat)

    params = init_params(k_p, IN_CHANNELS, D, MLP_HIDDEN, MLP_OUT_DIM, NUM_LAYERS)
    packed_params = pack_params(params)

    fwd = jax.jit(functools.partial(net_forward, packed_params, D, MLP_OUT_DIM,
                                    NUM_GRAPHS))
    (out_dict, total_loss, loss_dict, gae_loss,
     de1, de2, out_embed) = fwd(x_pad, a_hat_bf16, pool_mat_pad)

    jax.block_until_ready((out_dict["perf"], out_dict["emb_T"], de1, de2, out_embed))

    # Shape checks (match the module semantics)
    assert out_dict["perf"].shape == (NUM_GRAPHS, MLP_OUT_DIM)
    assert out_dict["emb_T"].shape == (NUM_GRAPHS, D)
    assert de1.shape == (NUM_GRAPHS, D) and de2.shape == (NUM_GRAPHS, D)
    assert out_embed.shape == (NUM_GRAPHS, D)

    # Numerical check against a pure-f32 JAX reference of the same math.
    # Tolerance is loosened vs. the previous f32 kernel because the GCN matmuls
    # now feed the MXU bf16 (f32 accumulation) — expected relative error ~1e-2.
    ref_pool, ref_perf = reference_forward(params, x, a_hat, pool_mat)
    assert bool(jnp.allclose(out_dict["emb_T"], ref_pool, atol=5e-2, rtol=5e-2))
    assert bool(jnp.allclose(out_dict["perf"], ref_perf, atol=5e-2, rtol=5e-2))

    # TODO(synk): node_attention / pragma_as_MLP / GAE branches and training
    # losses are flag-disabled in this configuration and not implemented.
    # TODO(synk): for realistic graph sizes (N >~ 2k), switch to a tiled grid:
    # stream A_hat row/col tiles with memory_space=pl.ANY or a ("parallel",
    # "arbitrary") grid + VMEM f32 accumulator (per-layer calls once A no longer
    # fits VMEM), so v7x's 64 MiB VMEM and its 2 TensorCores are actually used.
    print("KERNEL_OK")
</pallas_src>

<mosaic_0001>
module attributes {stable_mosaic.version = 11 : i64} {
  func.func @_net_fused_kernel(%arg0: memref<16x16xbf16, #tpu.memory_space<vmem>>, %arg1: memref<16x128xf32, #tpu.memory_space<vmem>>, %arg2: memref<8x16xf32, #tpu.memory_space<vmem>>, %arg3: memref<3x128x128xbf16, #tpu.memory_space<vmem>>, %arg4: memref<4x128x128xf32, #tpu.memory_space<vmem>>, %arg5: memref<8x128xf32, #tpu.memory_space<vmem>>, %arg6: memref<8x256xf32, #tpu.memory_space<vmem>>) attributes {dimension_semantics = [], scalar_prefetch = 0 : i64, scratch_operands = 0 : i64, tpu.core_type = #tpu.core_type<tc>} {
    %c0 = arith.constant 0 : index
    %c0_0 = arith.constant 0 : index
    %0 = vector.load %arg0[%c0, %c0_0] : memref<16x16xbf16, #tpu.memory_space<vmem>>, vector<16x16xbf16>
    %c0_1 = arith.constant 0 : index
    %c0_2 = arith.constant 0 : index
    %1 = vector.load %arg1[%c0_1, %c0_2] : memref<16x128xf32, #tpu.memory_space<vmem>>, vector<16x128xf32>
    %2 = arith.truncf %1 : vector<16x128xf32> to vector<16x128xbf16>
    %c0_3 = arith.constant 0 : index
    %c0_4 = arith.constant 0 : index
    %c0_5 = arith.constant 0 : index
    %3 = vector.load %arg3[%c0_3, %c0_4, %c0_5] : memref<3x128x128xbf16, #tpu.memory_space<vmem>>, vector<1x128x128xbf16>
    %4 = vector.shape_cast %3 : vector<1x128x128xbf16> to vector<128x128xbf16>
    %cst = arith.constant dense<0.000000e+00> : vector<16x128xf32>
    %5 = tpu.matmul %2, %4, %cst {dimension_numbers = #tpu.dot_dimension_numbers<[1], [0], [0], [1], [0, 0, 1, 1], [], []>} : vector<16x128xbf16>, vector<128x128xbf16>, vector<16x128xf32> -> vector<16x128xf32>
    %6 = arith.truncf %5 : vector<16x128xf32> to vector<16x128xbf16>
    %cst_6 = arith.constant dense<0.000000e+00> : vector<16x128xf32>
    %7 = tpu.matmul %0, %6, %cst_6 {dimension_numbers = #tpu.dot_dimension_numbers<[1], [0], [0], [1], [0, 0, 1, 1], [], []>} : vector<16x16xbf16>, vector<16x128xbf16>, vector<16x128xf32> -> vector<16x128xf32>
    %c0_7 = arith.constant 0 : index
    %c0_8 = arith.constant 0 : index
    %8 = vector.load %arg5[%c0_7, %c0_8] : memref<8x128xf32, #tpu.memory_space<vmem>>, vector<1x128xf32>
    %9 = vector.broadcast %8 : vector<1x128xf32> to vector<16x128xf32>
    %10 = arith.addf %7, %9 : vector<16x128xf32>
    %cst_9 = arith.constant 0.000000e+00 : f32
    %11 = vector.broadcast %cst_9 : f32 to vector<16x128xf32>
    %12 = arith.maximumf %10, %11 : vector<16x128xf32>
    %13 = arith.truncf %12 : vector<16x128xf32> to vector<16x128xbf16>
    %c1 = arith.constant 1 : index
    %c0_10 = arith.constant 0 : index
    %c0_11 = arith.constant 0 : index
    %14 = vector.load %arg3[%c1, %c0_10, %c0_11] : memref<3x128x128xbf16, #tpu.memory_space<vmem>>, vector<1x128x128xbf16>
    %15 = vector.shape_cast %14 : vector<1x128x128xbf16> to vector<128x128xbf16>
    %cst_12 = arith.constant dense<0.000000e+00> : vector<16x128xf32>
    %16 = tpu.matmul %13, %15, %cst_12 {dimension_numbers = #tpu.dot_dimension_numbers<[1], [0], [0], [1], [0, 0, 1, 1], [], []>} : vector<16x128xbf16>, vector<128x128xbf16>, vector<16x128xf32> -> vector<16x128xf32>
    %17 = arith.truncf %16 : vector<16x128xf32> to vector<16x128xbf16>
    %cst_13 = arith.constant dense<0.000000e+00> : vector<16x128xf32>
    %18 = tpu.matmul %0, %17, %cst_13 {dimension_numbers = #tpu.dot_dimension_numbers<[1], [0], [0], [1], [0, 0, 1, 1], [], []>} : vector<16x16xbf16>, vector<16x128xbf16>, vector<16x128xf32> -> vector<16x128xf32>
    %c1_14 = arith.constant 1 : index
    %c0_15 = arith.constant 0 : index
    %19 = vector.load %arg5[%c1_14, %c0_15] : memref<8x128xf32, #tpu.memory_space<vmem>>, vector<1x128xf32>
    %20 = vector.broadcast %19 : vector<1x128xf32> to vector<16x128xf32>
    %21 = arith.addf %18, %20 : vector<16x128xf32>
    %cst_16 = arith.constant 0.000000e+00 : f32
    %22 = vector.broadcast %cst_16 : f32 to vector<16x128xf32>
    %23 = arith.maximumf %21, %22 : vector<16x128xf32>
    %24 = arith.maximumf %12, %23 : vector<16x128xf32>
    %25 = arith.truncf %23 : vector<16x128xf32> to vector<16x128xbf16>
    %c2 = arith.constant 2 : index
    %c0_17 = arith.constant 0 : index
    %c0_18 = arith.constant 0 : index
    %26 = vector.load %arg3[%c2, %c0_17, %c0_18] : memref<3x128x128xbf16, #tpu.memory_space<vmem>>, vector<1x128x128xbf16>
    %27 = vector.shape_cast %26 : vector<1x128x128xbf16> to vector<128x128xbf16>
    %cst_19 = arith.constant dense<0.000000e+00> : vector<16x128xf32>
    %28 = tpu.matmul %25, %27, %cst_19 {dimension_numbers = #tpu.dot_dimension_numbers<[1], [0], [0], [1], [0, 0, 1, 1], [], []>} : vector<16x128xbf16>, vector<128x128xbf16>, vector<16x128xf32> -> vector<16x128xf32>
    %29 = arith.truncf %28 : vector<16x128xf32> to vector<16x128xbf16>
    %cst_20 = arith.constant dense<0.000000e+00> : vector<16x128xf32>
    %30 = tpu.matmul %0, %29, %cst_20 {dimension_numbers = #tpu.dot_dimension_numbers<[1], [0], [0], [1], [0, 0, 1, 1], [], []>} : vector<16x16xbf16>, vector<16x128xbf16>, vector<16x128xf32> -> vector<16x128xf32>
    %c2_21 = arith.constant 2 : index
    %c0_22 = arith.constant 0 : index
    %31 = vector.load %arg5[%c2_21, %c0_22] : memref<8x128xf32, #tpu.memory_space<vmem>>, vector<1x128xf32>
    %32 = vector.broadcast %31 : vector<1x128xf32> to vector<16x128xf32>
    %33 = arith.addf %30, %32 : vector<16x128xf32>
    %34 = arith.maximumf %24, %33 : vector<16x128xf32>
    %c0_23 = arith.constant 0 : index
    %c0_24 = arith.constant 0 : index
    %35 = vector.load %arg2[%c0_23, %c0_24] : memref<8x16xf32, #tpu.memory_space<vmem>>, vector<8x16xf32>
    %cst_25 = arith.constant dense<0.000000e+00> : vector<8x128xf32>
    %36 = tpu.matmul %35, %34, %cst_25 {dimension_numbers = #tpu.dot_dimension_numbers<[1], [0], [0], [1], [0, 0, 1, 1], [], []>} : vector<8x16xf32>, vector<16x128xf32>, vector<8x128xf32> -> vector<8x128xf32>
    %c0_26 = arith.constant 0 : index
    %c0_27 = arith.constant 0 : index
    %37 = vector.load %arg6[%c0_26, %c0_27] : memref<8x256xf32, #tpu.memory_space<vmem>>, vector<8x128xf32>
    tpu.vector_store %arg6[%c0_26, %c0_27], %36 {strides = array<i32>} : memref<8x256xf32, #tpu.memory_space<vmem>>, vector<8x128xf32>,
    %c0_28 = arith.constant 0 : index
    %c0_29 = arith.constant 0 : index
    %c0_30 = arith.constant 0 : index
    %38 = vector.load %arg4[%c0_28, %c0_29, %c0_30] : memref<4x128x128xf32, #tpu.memory_space<vmem>>, vector<1x128x128xf32>
    %39 = vector.shape_cast %38 : vector<1x128x128xf32> to vector<128x128xf32>
    %cst_31 = arith.constant dense<0.000000e+00> : vector<8x128xf32>
    %40 = tpu.matmul %36, %39, %cst_31 {dimension_numbers = #tpu.dot_dimension_numbers<[1], [0], [0], [1], [0, 0, 1, 1], [], []>} : vector<8x128xf32>, vector<128x128xf32>, vector<8x128xf32> -> vector<8x128xf32>
    %c3 = arith.constant 3 : index
    %c0_32 = arith.constant 0 : index
    %41 = vector.load %arg5[%c3, %c0_32] : memref<8x128xf32, #tpu.memory_space<vmem>>, vector<1x128xf32>
    %42 = vector.broadcast %41 : vector<1x128xf32> to vector<8x128xf32>
    %43 = arith.addf %40, %42 : vector<8x128xf32>
    %cst_33 = arith.constant 0.000000e+00 : f32
    %44 = vector.broadcast %cst_33 : f32 to vector<8x128xf32>
    %45 = arith.maximumf %43, %44 : vector<8x128xf32>
    %c1_34 = arith.constant 1 : index
    %c0_35 = arith.constant 0 : index
    %c0_36 = arith.constant 0 : index
    %46 = vector.load %arg4[%c1_34, %c0_35, %c0_36] : memref<4x128x128xf32, #tpu.memory_space<vmem>>, vector<1x128x128xf32>
    %47 = vector.shape_cast %46 : vector<1x128x128xf32> to vector<128x128xf32>
    %cst_37 = arith.constant dense<0.000000e+00> : vector<8x128xf32>
    %48 = tpu.matmul %45, %47, %cst_37 {dimension_numbers = #tpu.dot_dimension_numbers<[1], [0], [0], [1], [0, 0, 1, 1], [], []>} : vector<8x128xf32>, vector<128x128xf32>, vector<8x128xf32> -> vector<8x128xf32>
    %c4 = arith.constant 4 : index
    %c0_38 = arith.constant 0 : index
    %49 = vector.load %arg5[%c4, %c0_38] : memref<8x128xf32, #tpu.memory_space<vmem>>, vector<1x128xf32>
    %50 = vector.broadcast %49 : vector<1x128xf32> to vector<8x128xf32>
    %51 = arith.addf %48, %50 : vector<8x128xf32>
    %cst_39 = arith.constant 0.000000e+00 : f32
    %52 = vector.broadcast %cst_39 : f32 to vector<8x128xf32>
    %53 = arith.maximumf %51, %52 : vector<8x128xf32>
    %c2_40 = arith.constant 2 : index
    %c0_41 = arith.constant 0 : index
    %c0_42 = arith.constant 0 : index
    %54 = vector.load %arg4[%c2_40, %c0_41, %c0_42] : memref<4x128x128xf32, #tpu.memory_space<vmem>>, vector<1x128x128xf32>
    %55 = vector.shape_cast %54 : vector<1x128x128xf32> to vector<128x128xf32>
    %cst_43 = arith.constant dense<0.000000e+00> : vector<8x128xf32>
    %56 = tpu.matmul %53, %55, %cst_43 {dimension_numbers = #tpu.dot_dimension_numbers<[1], [0], [0], [1], [0, 0, 1, 1], [], []>} : vector<8x128xf32>, vector<128x128xf32>, vector<8x128xf32> -> vector<8x128xf32>
    %c5 = arith.constant 5 : index
    %c0_44 = arith.constant 0 : index
    %57 = vector.load %arg5[%c5, %c0_44] : memref<8x128xf32, #tpu.memory_space<vmem>>, vector<1x128xf32>
    %58 = vector.broadcast %57 : vector<1x128xf32> to vector<8x128xf32>
    %59 = arith.addf %56, %58 : vector<8x128xf32>
    %cst_45 = arith.constant 0.000000e+00 : f32
    %60 = vector.broadcast %cst_45 : f32 to vector<8x128xf32>
    %61 = arith.maximumf %59, %60 : vector<8x128xf32>
    %c3_46 = arith.constant 3 : index
    %c0_47 = arith.constant 0 : index
    %c0_48 = arith.constant 0 : index
    %62 = vector.load %arg4[%c3_46, %c0_47, %c0_48] : memref<4x128x128xf32, #tpu.memory_space<vmem>>, vector<1x128x128xf32>
    %63 = vector.shape_cast %62 : vector<1x128x128xf32> to vector<128x128xf32>
    %cst_49 = arith.constant dense<0.000000e+00> : vector<8x128xf32>
    %64 = tpu.matmul %61, %63, %cst_49 {dimension_numbers = #tpu.dot_dimension_numbers<[1], [0], [0], [1], [0, 0, 1, 1], [], []>} : vector<8x128xf32>, vector<128x128xf32>, vector<8x128xf32> -> vector<8x128xf32>
    %c6 = arith.constant 6 : index
    %c0_50 = arith.constant 0 : index
    %65 = vector.load %arg5[%c6, %c0_50] : memref<8x128xf32, #tpu.memory_space<vmem>>, vector<1x128xf32>
    %66 = vector.broadcast %65 : vector<1x128xf32> to vector<8x128xf32>
    %67 = arith.addf %64, %66 : vector<8x128xf32>
    %c0_51 = arith.constant 0 : index
    %c128 = arith.constant 128 : index
    %68 = vector.load %arg6[%c0_51, %c128] : memref<8x256xf32, #tpu.memory_space<vmem>>, vector<8x128xf32>
    tpu.vector_store %arg6[%c0_51, %c128], %67 {strides = array<i32>} : memref<8x256xf32, #tpu.memory_space<vmem>>, vector<8x128xf32>,
    return
  }
}

</mosaic_0001>

<llo_original>
// kernel: net_forward.1
$region0: #{net_forward.1}
  #allocation0 [shape = 'u32[]', space=smem, size = 0x4, offset = 0x4, fixed_abs, tag = 'smem constant byte address 0x4 - core index']
  #allocation1 [shape = 'u32[144,128]{1,0:T(1,128)}', space=vmem, size = 0x12000, scoped, tag = 'internal scratch']
  %s0 = inlined_call_operand.hbm [shape: bf16[16,16], index: 0, kind: input, shape index: {}]
  %s1 = inlined_call_operand.vmem [shape: f32[16,128], index: 1, kind: input, shape index: {}]
  %s2 = inlined_call_operand.hbm [shape: f32[8,16], index: 2, kind: input, shape index: {}]
  %s3 = inlined_call_operand.hbm [shape: bf16[3,128,128], index: 3, kind: input, shape index: {}]
  %s4 = inlined_call_operand.hbm [shape: f32[4,128,128], index: 4, kind: input, shape index: {}]
  %s5 = inlined_call_operand.vmem [shape: f32[8,128], index: 5, kind: input, shape index: {}]
  %s6 = inlined_call_operand.vmem [shape: f32[8,256], index: 6, kind: output, shape index: {}]
  %s7 = sld [smem:[#allocation0]]
  $region50: #{net_forward.1} parent=0
    _
  %s9 = ssub.s32 1, %s7
  %s10 = scalar_select 0, %s9, %s7
  $region1: #{net_forward.1} parent=0
    #allocation2 [shape = 'u8[4096]{0}', space=vmem, size = 0x1000, scoped, tag = 'input window, operand 0, single buffered']
    #allocation3 [shape = 's32[1]{0}', space=sflag, size = 0x4, scoped, tag = 'scoped memory for net_forward.1']
    #allocation4 [shape = 'u8[4096]{0}', space=vmem, size = 0x1000, scoped, tag = 'input window, operand 2, single buffered']
    #allocation5 [shape = 's32[1]{0}', space=sflag, size = 0x4, scoped, tag = 'scoped memory for net_forward.1']
    #allocation6 [shape = 'u8[98304]{0}', space=vmem, size = 0x18000, scoped, tag = 'input window, operand 3, single buffered']
    #allocation7 [shape = 'u8[262144]{0}', space=vmem, size = 0x40000, scoped, tag = 'input window, operand 4, single buffered']
    #allocation8 [shape = 's32[1]{0}', space=sflag, size = 0x4, scoped, tag = 'scoped memory for net_forward.1']
    %11 = vsyncpa [#allocation3], 0
    %12 = vsyncpa [#allocation5], 0
    %13 = vsyncpa [#allocation8], 0
    // Predicated region
    $region2: #{net_forward.1} parent=1 // pred_check
      _
    $region3: #{net_forward.1} parent=1 // pred_check_branch
      %15 = sbr.rel (0) target = $region5
    $region4: #{net_forward.1} parent=1 // pred_region
      %s17 = ssub.s32 128, 128
      %18 = vsyncadd [#allocation3], %s17
      %s19 = sshll.u32 [#allocation2], 4
      %s20 = int_to_ptr.vmem [resolvable:$true] %s19
      %25 = dma.hbm_to_vmem [thread:$0]  %s0, 128, %s20, [#allocation3], 64, 64, 4
    $region5: #{net_forward.1} parent=1 // pred_fallthru
      _
    // Predicated region
    $region6: #{net_forward.1} parent=1 // pred_check
      _
    $region7: #{net_forward.1} parent=1 // pred_check_branch
      %27 = sbr.rel (0) target = $region9
    $region8: #{net_forward.1} parent=1 // pred_region
      _
    $region9: #{net_forward.1} parent=1 // pred_fallthru
      _
    // Predicated region
    $region10: #{net_forward.1} parent=1 // pred_check
      _
    $region11: #{net_forward.1} parent=1 // pred_check_branch
      %29 = sbr.rel (0) target = $region13
    $region12: #{net_forward.1} parent=1 // pred_region
      %s31 = ssub.s32 128, 128
      %32 = vsyncadd [#allocation5], %s31
      %s34 = sshll.u32 [#allocation4], 4
      %s35 = int_to_ptr.vmem [resolvable:$true] %s34
      %37 = dma.hbm_to_vmem [thread:$0]  %s2, 128, %s35, [#allocation5]
    $region13: #{net_forward.1} parent=1 // pred_fallthru
      _
    // Predicated region
    $region14: #{net_forward.1} parent=1 // pred_check
      _
    $region15: #{net_forward.1} parent=1 // pred_check_branch
      %39 = sbr.rel (0) target = $region17
    $region16: #{net_forward.1} parent=1 // pred_region
      %s41 = ssub.s32 3072, 3072
      %42 = vsyncadd [#allocation5], %s41
      %s43 = sshll.u32 [#allocation6], 4
      %s44 = int_to_ptr.vmem [resolvable:$true] %s43
      %49 = dma.hbm_to_vmem [thread:$0]  %s3, 3072, %s44, [#allocation5], 64, 64, 4
    $region17: #{net_forward.1} parent=1 // pred_fallthru
      _
    // Predicated region
    $region18: #{net_forward.1} parent=1 // pred_check
      _
    $region19: #{net_forward.1} parent=1 // pred_check_branch
      %51 = sbr.rel (0) target = $region21
    $region20: #{net_forward.1} parent=1 // pred_region
      %s53 = ssub.s32 8192, 8192
      %54 = vsyncadd [#allocation8], %s53
      %s55 = sshll.u32 [#allocation7], 4
      %s56 = int_to_ptr.vmem [resolvable:$true] %s55
      %61 = dma.hbm_to_vmem [thread:$0]  %s4, 8192, %s56, [#allocation8], 128, 128, 8
    $region21: #{net_forward.1} parent=1 // pred_fallthru
      _
    // Predicated region
    $region22: #{net_forward.1} parent=1 // pred_check
      _
    $region23: #{net_forward.1} parent=1 // pred_check_branch
      %63 = sbr.rel (0) target = $region25
    $region24: #{net_forward.1} parent=1 // pred_region
      _
    $region25: #{net_forward.1} parent=1 // pred_fallthru
      _
    // Predicated region
    $region26: #{net_forward.1} parent=1 // pred_check
      _
    $region27: #{net_forward.1} parent=1 // pred_check_branch
      %65 = sbr.rel (0) target = $region29
    $region28: #{net_forward.1} parent=1 // pred_region
      %66 = dma.done [#allocation3], 128
    $region29: #{net_forward.1} parent=1 // pred_fallthru
      _
    // Predicated region
    $region30: #{net_forward.1} parent=1 // pred_check
      _
    $region31: #{net_forward.1} parent=1 // pred_check_branch
      %68 = sbr.rel (0) target = $region33
    $region32: #{net_forward.1} parent=1 // pred_region
      %69 = dma.done [#allocation5], 128
    $region33: #{net_forward.1} parent=1 // pred_fallthru
      _
    // Predicated region
    $region34: #{net_forward.1} parent=1 // pred_check
      _
    $region35: #{net_forward.1} parent=1 // pred_check_branch
      %71 = sbr.rel (0) target = $region37
    $region36: #{net_forward.1} parent=1 // pred_region
      %72 = dma.done [#allocation5], 3072
    $region37: #{net_forward.1} parent=1 // pred_fallthru
      _
    // Predicated region
    $region38: #{net_forward.1} parent=1 // pred_check
      _
    $region39: #{net_forward.1} parent=1 // pred_check_branch
      %74 = sbr.rel (0) target = $region41
    $region40: #{net_forward.1} parent=1 // pred_region
      %75 = dma.done [#allocation8], 8192
    $region41: #{net_forward.1} parent=1 // pred_fallthru
      _
    %v77 = vld [vmem:[#allocation2] sm:$0xf]
    %v78 = vld [vmem:[#allocation2 + $0x4] sm:$0xf]
    %v79 = vld [vmem:[%s1] sm:$0xff]
    %v80 = vld [vmem:[%s1 + $0x8] sm:$0xff]
    %v81 = vpack.c.bf16 %v80, %v79
    %v82 = vld [vmem:[#allocation6] sm:$0xf]
    %v83 = vld [vmem:[#allocation6 + $0x4] sm:$0xf]
    %v84 = vld [vmem:[#allocation6 + $0x8] sm:$0xf]
    %v85 = vld [vmem:[#allocation6 + $0xc] sm:$0xf]
    %v86 = vld [vmem:[#allocation6 + $0x10] sm:$0xf]
    %v87 = vld [vmem:[#allocation6 + $0x14] sm:$0xf]
    %v88 = vld [vmem:[#allocation6 + $0x18] sm:$0xf]
    %v89 = vld [vmem:[#allocation6 + $0x1c] sm:$0xf]
    %v90 = vld [vmem:[#allocation6 + $0x20] sm:$0xf]
    %v91 = vld [vmem:[#allocation6 + $0x24] sm:$0xf]
    %v92 = vld [vmem:[#allocation6 + $0x28] sm:$0xf]
    %v93 = vld [vmem:[#allocation6 + $0x2c] sm:$0xf]
    %v94 = vld [vmem:[#allocation6 + $0x30] sm:$0xf]
    %v95 = vld [vmem:[#allocation6 + $0x34] sm:$0xf]
    %v96 = vld [vmem:[#allocation6 + $0x38] sm:$0xf]
    %v97 = vld [vmem:[#allocation6 + $0x3c] sm:$0xf]
    %v114 = vunpack.c.l.b16 %v82
    %v115 = vunpack.c.l.b16 %v83
    %v116 = vunpack.c.l.b16 %v84
    %v117 = vunpack.c.l.b16 %v85
    %v118 = vunpack.c.l.b16 %v86
    %v119 = vunpack.c.l.b16 %v87
    %v120 = vunpack.c.l.b16 %v88
    %v121 = vunpack.c.l.b16 %v89
    %v122 = vunpack.c.l.b16 %v90
    %v123 = vunpack.c.l.b16 %v91
    %v124 = vunpack.c.l.b16 %v92
    %v125 = vunpack.c.l.b16 %v93
    %v126 = vunpack.c.l.b16 %v94
    %v127 = vunpack.c.l.b16 %v95
    %v128 = vunpack.c.l.b16 %v96
    %v129 = vunpack.c.l.b16 %v97
    %v130 = vpack.c.b16 %v115, %v114
    %v131 = vpack.c.b16 %v117, %v116
    %v132 = vpack.c.b16 %v119, %v118
    %v133 = vpack.c.b16 %v121, %v120
    %v134 = vpack.c.b16 %v123, %v122
    %v135 = vpack.c.b16 %v125, %v124
    %v136 = vpack.c.b16 %v127, %v126
    %v137 = vpack.c.b16 %v129, %v128
    %146 = vmatprep.subr.bf16.mxu0 0
    %147 = vmatpush1.bf16.msra.mxu0 %v130
    %148 = vmatprep.subr.bf16.mxu0 0
    %149 = vmatpush1.bf16.msra.mxu0 %v131
    %150 = vmatprep.subr.bf16.mxu0 0
    %151 = vmatpush1.bf16.msra.mxu0 %v132
    %152 = vmatprep.subr.bf16.mxu0 0
    %153 = vmatpush1.bf16.msra.mxu0 %v133
    %154 = vmatprep.subr.bf16.mxu0 0
    %155 = vmatpush1.bf16.msra.mxu0 %v134
    %156 = vmatprep.subr.bf16.mxu0 0
    %157 = vmatpush1.bf16.msra.mxu0 %v135
    %158 = vmatprep.subr.bf16.mxu0 0
    %159 = vmatpush1.bf16.msra.mxu0 %v136
    %160 = vmatprep.subr.bf16.mxu0 0
    %161 = vmatpush1.bf16.msra.mxu0 %v137
    %162 = vmatprep.subr.bf16.mxu0 0
    %163 = vmatpush1.bf16.msra.mxu0 0
    %164 = vmatprep.subr.bf16.mxu0 0
    %165 = vmatpush1.bf16.msra.mxu0 0
    %166 = vmatprep.subr.bf16.mxu0 0
    %167 = vmatpush1.bf16.msra.mxu0 0
    %168 = vmatprep.subr.bf16.mxu0 0
    %169 = vmatpush1.bf16.msra.mxu0 0
    %170 = vmatprep.subr.bf16.mxu0 0
    %171 = vmatpush1.bf16.msra.mxu0 0
    %172 = vmatprep.subr.bf16.mxu0 0
    %173 = vmatpush1.bf16.msra.mxu0 0
    %174 = vmatprep.subr.bf16.mxu0 0
    %175 = vmatpush1.bf16.msra.mxu0 0
    %176 = vmatprep.subr.bf16.mxu0 0
    %177 = vmatpush1.bf16.msra.mxu0 0
    %178 = vmatprep.mubr.bf16.mxu0 0
    %179 = vmatmul.mubr.bf16.gmra.mrb[0].mxu0 %v81
    %v180 = vpop.f32.mrb[0].mxu0
    %v181 = vadd.f32 0.0, %v180
    %v182 = vpop.f32.mrb[0].mxu0
    %v183 = vpop.f32.mrb[0].mxu0
    %v184 = vadd.f32 0.0, %v183
    %v185 = vpop.f32.mrb[0].mxu0
    %186 = vdwg.mxu0
    %v187 = vpack.c.bf16 %v184, %v181
    %v188 = vld [vmem:[%s5] sm:$0x1]
    %v189 = vlaneseq
    %v190 = vshrl.u32 %v189, 7
    %v191 = vsub.s32 0, %v190
    %v192 = vrot.slane %v188, %v191
    %v195 = vunpack.c.l.b16 %v77
    %v196 = vunpack.c.l.b16 %v78
    %v197 = vpack.c.b16 %v196, %v195
    %vm198 = vcmask 130048
    %v200 = vsel %vm198, %v197, 0
    %202 = vmatprep.subr.bf16.mxu0 0
    %203 = vmatpush1.bf16.msra.mxu0 %v187
    %204 = vmatprep.subr.bf16.mxu0 0
    %205 = vmatpush1.bf16.msra.mxu0 0
    %206 = vmatprep.subr.bf16.mxu0 0
    %207 = vmatpush1.bf16.msra.mxu0 0
    %208 = vmatprep.subr.bf16.mxu0 0
    %209 = vmatpush1.bf16.msra.mxu0 0
    %210 = vmatprep.subr.bf16.mxu0 0
    %211 = vmatpush1.bf16.msra.mxu0 0
    %212 = vmatprep.subr.bf16.mxu0 0
    %213 = vmatpush1.bf16.msra.mxu0 0
    %214 = vmatprep.subr.bf16.mxu0 0
    %215 = vmatpush1.bf16.msra.mxu0 0
    %216 = vmatprep.subr.bf16.mxu0 0
    %217 = vmatpush1.bf16.msra.mxu0 0
    %218 = vmatprep.subr.bf16.mxu0 0
    %219 = vmatpush1.bf16.msra.mxu0 0
    %220 = vmatprep.subr.bf16.mxu0 0
    %221 = vmatpush1.bf16.msra.mxu0 0
    %222 = vmatprep.subr.bf16.mxu0 0
    %223 = vmatpush1.bf16.msra.mxu0 0
    %224 = vmatprep.subr.bf16.mxu0 0
    %225 = vmatpush1.bf16.msra.mxu0 0
    %226 = vmatprep.subr.bf16.mxu0 0
    %227 = vmatpush1.bf16.msra.mxu0 0
    %228 = vmatprep.subr.bf16.mxu0 0
    %229 = vmatpush1.bf16.msra.mxu0 0
    %230 = vmatprep.subr.bf16.mxu0 0
    %231 = vmatpush1.bf16.msra.mxu0 0
    %232 = vmatprep.subr.bf16.mxu0 0
    %233 = vmatpush1.bf16.msra.mxu0 0
    %234 = vmatprep.mubr.bf16.mxu0 0
    %235 = vmatmul.mubr.bf16.gmra.mrb[0].mxu0 %v200
    %v236 = vpop.f32.mrb[0].mxu0
    %v237 = vadd.f32 %v192, %v236
    %v238 = vpop.f32.mrb[0].mxu0
    %v239 = vpop.f32.mrb[0].mxu0
    %v240 = vadd.f32 %v192, %v239
    %v241 = vpop.f32.mrb[0].mxu0
    %242 = vdwg.mxu0
    %v243 = vmax.f32 %v237, 0.0
    %v244 = vmax.f32 %v240, 0.0
    %v245 = vpack.c.bf16 %v244, %v243
    %s246 = scalar_lea.vmem [#allocation6], 64
    %v247 = vld [vmem:[%s246] sm:$0xf]
    %v248 = vld [vmem:[%s246 + $0x4] sm:$0xf]
    %v249 = vld [vmem:[%s246 + $0x8] sm:$0xf]
    %v250 = vld [vmem:[%s246 + $0xc] sm:$0xf]
    %v251 = vld [vmem:[%s246 + $0x10] sm:$0xf]
    %v252 = vld [vmem:[%s246 + $0x14] sm:$0xf]
    %v253 = vld [vmem:[%s246 + $0x18] sm:$0xf]
    %v254 = vld [vmem:[%s246 + $0x1c] sm:$0xf]
    %v255 = vld [vmem:[%s246 + $0x20] sm:$0xf]
    %v256 = vld [vmem:[%s246 + $0x24] sm:$0xf]
    %v257 = vld [vmem:[%s246 + $0x28] sm:$0xf]
    %v258 = vld [vmem:[%s246 + $0x2c] sm:$0xf]
    %v259 = vld [vmem:[%s246 + $0x30] sm:$0xf]
    %v260 = vld [vmem:[%s246 + $0x34] sm:$0xf]
    %v261 = vld [vmem:[%s246 + $0x38] sm:$0xf]
    %v262 = vld [vmem:[%s246 + $0x3c] sm:$0xf]
    %v279 = vunpack.c.l.b16 %v247
    %v280 = vunpack.c.l.b16 %v248
    %v281 = vunpack.c.l.b16 %v249
    %v282 = vunpack.c.l.b16 %v250
    %v283 = vunpack.c.l.b16 %v251
    %v284 = vunpack.c.l.b16 %v252
    %v285 = vunpack.c.l.b16 %v253
    %v286 = vunpack.c.l.b16 %v254
    %v287 = vunpack.c.l.b16 %v255
    %v288 = vunpack.c.l.b16 %v256
    %v289 = vunpack.c.l.b16 %v257
    %v290 = vunpack.c.l.b16 %v258
    %v291 = vunpack.c.l.b16 %v259
    %v292 = vunpack.c.l.b16 %v260
    %v293 = vunpack.c.l.b16 %v261
    %v294 = vunpack.c.l.b16 %v262
    %v295 = vpack.c.b16 %v280, %v279
    %v296 = vpack.c.b16 %v282, %v281
    %v297 = vpack.c.b16 %v284, %v283
    %v298 = vpack.c.b16 %v286, %v285
    %v299 = vpack.c.b16 %v288, %v287
    %v300 = vpack.c.b16 %v290, %v289
    %v301 = vpack.c.b16 %v292, %v291
    %v302 = vpack.c.b16 %v294, %v293
    %311 = vmatprep.subr.bf16.mxu0 0
    %312 = vmatpush1.bf16.msra.mxu0 %v295
    %313 = vmatprep.subr.bf16.mxu0 0
    %314 = vmatpush1.bf16.msra.mxu0 %v296
    %315 = vmatprep.subr.bf16.mxu0 0
    %316 = vmatpush1.bf16.msra.mxu0 %v297
    %317 = vmatprep.subr.bf16.mxu0 0
    %318 = vmatpush1.bf16.msra.mxu0 %v298
    %319 = vmatprep.subr.bf16.mxu0 0
    %320 = vmatpush1.bf16.msra.mxu0 %v299
    %321 = vmatprep.subr.bf16.mxu0 0
    %322 = vmatpush1.bf16.msra.mxu0 %v300
    %323 = vmatprep.subr.bf16.mxu0 0
    %324 = vmatpush1.bf16.msra.mxu0 %v301
    %325 = vmatprep.subr.bf16.mxu0 0
    %326 = vmatpush1.bf16.msra.mxu0 %v302
    %327 = vmatprep.subr.bf16.mxu0 0
    %328 = vmatpush1.bf16.msra.mxu0 0
    %329 = vmatprep.subr.bf16.mxu0 0
    %330 = vmatpush1.bf16.msra.mxu0 0
    %331 = vmatprep.subr.bf16.mxu0 0
    %332 = vmatpush1.bf16.msra.mxu0 0
    %333 = vmatprep.subr.bf16.mxu0 0
    %334 = vmatpush1.bf16.msra.mxu0 0
    %335 = vmatprep.subr.bf16.mxu0 0
    %336 = vmatpush1.bf16.msra.mxu0 0
    %337 = vmatprep.subr.bf16.mxu0 0
    %338 = vmatpush1.bf16.msra.mxu0 0
    %339 = vmatprep.subr.bf16.mxu0 0
    %340 = vmatpush1.bf16.msra.mxu0 0
    %341 = vmatprep.subr.bf16.mxu0 0
    %342 = vmatpush1.bf16.msra.mxu0 0
    %343 = vmatprep.mubr.bf16.mxu0 0
    %344 = vmatmul.mubr.bf16.gmra.mrb[0].mxu0 %v245
    %v345 = vpop.f32.mrb[0].mxu0
    %v346 = vadd.f32 0.0, %v345
    %v347 = vpop.f32.mrb[0].mxu0
    %v348 = vpop.f32.mrb[0].mxu0
    %v349 = vadd.f32 0.0, %v348
    %v350 = vpop.f32.mrb[0].mxu0
    %351 = vdwg.mxu0
    %v352 = vpack.c.bf16 %v349, %v346
    %v353 = vld [vmem:[%s5 + $0x1] sm:$0x1]
    %v354 = vlaneseq
    %v355 = vshrl.u32 %v354, 7
    %v356 = vsub.s32 0, %v355
    %v357 = vrot.slane %v353, %v356
    %358 = vmatprep.subr.bf16.mxu0 0
    %359 = vmatpush1.bf16.msra.mxu0 %v352
    %360 = vmatprep.subr.bf16.mxu0 0
    %361 = vmatpush1.bf16.msra.mxu0 0
    %362 = vmatprep.subr.bf16.mxu0 0
    %363 = vmatpush1.bf16.msra.mxu0 0
    %364 = vmatprep.subr.bf16.mxu0 0
    %365 = vmatpush1.bf16.msra.mxu0 0
    %366 = vmatprep.subr.bf16.mxu0 0
    %367 = vmatpush1.bf16.msra.mxu0 0
    %368 = vmatprep.subr.bf16.mxu0 0
    %369 = vmatpush1.bf16.msra.mxu0 0
    %370 = vmatprep.subr.bf16.mxu0 0
    %371 = vmatpush1.bf16.msra.mxu0 0
    %372 = vmatprep.subr.bf16.mxu0 0
    %373 = vmatpush1.bf16.msra.mxu0 0
    %374 = vmatprep.subr.bf16.mxu0 0
    %375 = vmatpush1.bf16.msra.mxu0 0
    %376 = vmatprep.subr.bf16.mxu0 0
    %377 = vmatpush1.bf16.msra.mxu0 0
    %378 = vmatprep.subr.bf16.mxu0 0
    %379 = vmatpush1.bf16.msra.mxu0 0
    %380 = vmatprep.subr.bf16.mxu0 0
    %381 = vmatpush1.bf16.msra.mxu0 0
    %382 = vmatprep.subr.bf16.mxu0 0
    %383 = vmatpush1.bf16.msra.mxu0 0
    %384 = vmatprep.subr.bf16.mxu0 0
    %385 = vmatpush1.bf16.msra.mxu0 0
    %386 = vmatprep.subr.bf16.mxu0 0
    %387 = vmatpush1.bf16.msra.mxu0 0
    %388 = vmatprep.subr.bf16.mxu0 0
    %389 = vmatpush1.bf16.msra.mxu0 0
    %390 = vmatprep.mubr.bf16.mxu0 0
    %391 = vmatmul.mubr.bf16.gmra.mrb[0].mxu0 %v200
    %v392 = vpop.f32.mrb[0].mxu0
    %v393 = vadd.f32 %v357, %v392
    %v394 = vpop.f32.mrb[0].mxu0
    %v395 = vpop.f32.mrb[0].mxu0
    %v396 = vadd.f32 %v357, %v395
    %v397 = vpop.f32.mrb[0].mxu0
    %398 = vdwg.mxu0
    %v399 = vmax.f32 %v393, 0.0
    %v400 = vmax.f32 %v396, 0.0
    %v401 = vmax.f32 %v243, %v399
    %v402 = vmax.f32 %v244, %v400
    %v403 = vpack.c.bf16 %v400, %v399
    %s404 = scalar_lea.vmem [#allocation6], 128
    %v405 = vld [vmem:[%s404] sm:$0xf]
    %v406 = vld [vmem:[%s404 + $0x4] sm:$0xf]
    %v407 = vld [vmem:[%s404 + $0x8] sm:$0xf]
    %v408 = vld [vmem:[%s404 + $0xc] sm:$0xf]
    %v409 = vld [vmem:[%s404 + $0x10] sm:$0xf]
    %v410 = vld [vmem:[%s404 + $0x14] sm:$0xf]
    %v411 = vld [vmem:[%s404 + $0x18] sm:$0xf]
    %v412 = vld [vmem:[%s404 + $0x1c] sm:$0xf]
    %v413 = vld [vmem:[%s404 + $0x20] sm:$0xf]
    %v414 = vld [vmem:[%s404 + $0x24] sm:$0xf]
    %v415 = vld [vmem:[%s404 + $0x28] sm:$0xf]
    %v416 = vld [vmem:[%s404 + $0x2c] sm:$0xf]
    %v417 = vld [vmem:[%s404 + $0x30] sm:$0xf]
    %v418 = vld [vmem:[%s404 + $0x34] sm:$0xf]
    %v419 = vld [vmem:[%s404 + $0x38] sm:$0xf]
    %v420 = vld [vmem:[%s404 + $0x3c] sm:$0xf]
    %v437 = vunpack.c.l.b16 %v405
    %v438 = vunpack.c.l.b16 %v406
    %v439 = vunpack.c.l.b16 %v407
    %v440 = vunpack.c.l.b16 %v408
    %v441 = vunpack.c.l.b16 %v409
    %v442 = vunpack.c.l.b16 %v410
    %v443 = vunpack.c.l.b16 %v411
    %v444 = vunpack.c.l.b16 %v412
    %v445 = vunpack.c.l.b16 %v413
    %v446 = vunpack.c.l.b16 %v414
    %v447 = vunpack.c.l.b16 %v415
    %v448 = vunpack.c.l.b16 %v416
    %v449 = vunpack.c.l.b16 %v417
    %v450 = vunpack.c.l.b16 %v418
    %v451 = vunpack.c.l.b16 %v419
    %v452 = vunpack.c.l.b16 %v420
    %v453 = vpack.c.b16 %v438, %v437
    %v454 = vpack.c.b16 %v440, %v439
    %v455 = vpack.c.b16 %v442, %v441
    %v456 = vpack.c.b16 %v444, %v443
    %v457 = vpack.c.b16 %v446, %v445
    %v458 = vpack.c.b16 %v448, %v447
    %v459 = vpack.c.b16 %v450, %v449
    %v460 = vpack.c.b16 %v452, %v451
    %469 = vmatprep.subr.bf16.mxu0 0
    %470 = vmatpush1.bf16.msra.mxu0 %v453
    %471 = vmatprep.subr.bf16.mxu0 0
    %472 = vmatpush1.bf16.msra.mxu0 %v454
    %473 = vmatprep.subr.bf16.mxu0 0
    %474 = vmatpush1.bf16.msra.mxu0 %v455
    %475 = vmatprep.subr.bf16.mxu0 0
    %476 = vmatpush1.bf16.msra.mxu0 %v456
    %477 = vmatprep.subr.bf16.mxu0 0
    %478 = vmatpush1.bf16.msra.mxu0 %v457
    %479 = vmatprep.subr.bf16.mxu0 0
    %480 = vmatpush1.bf16.msra.mxu0 %v458
    %481 = vmatprep.subr.bf16.mxu0 0
    %482 = vmatpush1.bf16.msra.mxu0 %v459
    %483 = vmatprep.subr.bf16.mxu0 0
    %484 = vmatpush1.bf16.msra.mxu0 %v460
    %485 = vmatprep.subr.bf16.mxu0 0
    %486 = vmatpush1.bf16.msra.mxu0 0
    %487 = vmatprep.subr.bf16.mxu0 0
    %488 = vmatpush1.bf16.msra.mxu0 0
    %489 = vmatprep.subr.bf16.mxu0 0
    %490 = vmatpush1.bf16.msra.mxu0 0
    %491 = vmatprep.subr.bf16.mxu0 0
    %492 = vmatpush1.bf16.msra.mxu0 0
    %493 = vmatprep.subr.bf16.mxu0 0
    %494 = vmatpush1.bf16.msra.mxu0 0
    %495 = vmatprep.subr.bf16.mxu0 0
    %496 = vmatpush1.bf16.msra.mxu0 0
    %497 = vmatprep.subr.bf16.mxu0 0
    %498 = vmatpush1.bf16.msra.mxu0 0
    %499 = vmatprep.subr.bf16.mxu0 0
    %500 = vmatpush1.bf16.msra.mxu0 0
    %501 = vmatprep.mubr.bf16.mxu0 0
    %502 = vmatmul.mubr.bf16.gmra.mrb[0].mxu0 %v403
    %v503 = vpop.f32.mrb[0].mxu0
    %v504 = vadd.f32 0.0, %v503
    %v505 = vpop.f32.mrb[0].mxu0
    %v506 = vpop.f32.mrb[0].mxu0
    %v507 = vadd.f32 0.0, %v506
    %v508 = vpop.f32.mrb[0].mxu0
    %509 = vdwg.mxu0
    %v510 = vpack.c.bf16 %v507, %v504
    %v511 = vld [vmem:[%s5 + $0x2] sm:$0x1]
    %v512 = vlaneseq
    %v513 = vshrl.u32 %v512, 7
    %v514 = vsub.s32 0, %v513
    %v515 = vrot.slane %v511, %v514
    %516 = vmatprep.subr.bf16.mxu0 0
    %517 = vmatpush1.bf16.msra.mxu0 %v510
    %518 = vmatprep.subr.bf16.mxu0 0
    %519 = vmatpush1.bf16.msra.mxu0 0
    %520 = vmatprep.subr.bf16.mxu0 0
    %521 = vmatpush1.bf16.msra.mxu0 0
    %522 = vmatprep.subr.bf16.mxu0 0
    %523 = vmatpush1.bf16.msra.mxu0 0
    %524 = vmatprep.subr.bf16.mxu0 0
    %525 = vmatpush1.bf16.msra.mxu0 0
    %526 = vmatprep.subr.bf16.mxu0 0
    %527 = vmatpush1.bf16.msra.mxu0 0
    %528 = vmatprep.subr.bf16.mxu0 0
    %529 = vmatpush1.bf16.msra.mxu0 0
    %530 = vmatprep.subr.bf16.mxu0 0
    %531 = vmatpush1.bf16.msra.mxu0 0
    %532 = vmatprep.subr.bf16.mxu0 0
    %533 = vmatpush1.bf16.msra.mxu0 0
    %534 = vmatprep.subr.bf16.mxu0 0
    %535 = vmatpush1.bf16.msra.mxu0 0
    %536 = vmatprep.subr.bf16.mxu0 0
    %537 = vmatpush1.bf16.msra.mxu0 0
    %538 = vmatprep.subr.bf16.mxu0 0
    %539 = vmatpush1.bf16.msra.mxu0 0
    %540 = vmatprep.subr.bf16.mxu0 0
    %541 = vmatpush1.bf16.msra.mxu0 0
    %542 = vmatprep.subr.bf16.mxu0 0
    %543 = vmatpush1.bf16.msra.mxu0 0
    %544 = vmatprep.subr.bf16.mxu0 0
    %545 = vmatpush1.bf16.msra.mxu0 0
    %546 = vmatprep.subr.bf16.mxu0 0
    %547 = vmatpush1.bf16.msra.mxu0 0
    %548 = vmatprep.mubr.bf16.mxu0 0
    %549 = vmatmul.mubr.bf16.gmra.mrb[0].mxu0 %v200
    %v550 = vpop.f32.mrb[0].mxu0
    %v551 = vadd.f32 %v515, %v550
    %v552 = vpop.f32.mrb[0].mxu0
    %v553 = vpop.f32.mrb[0].mxu0
    %v554 = vadd.f32 %v515, %v553
    %v555 = vpop.f32.mrb[0].mxu0
    %556 = vdwg.mxu0
    %v557 = vmax.f32 %v401, %v551
    %v558 = vmax.f32 %v402, %v554
    %v559 = vld [vmem:[#allocation4] sm:$0xff]
    %v561 = vsel %vm198, %v559, 0
    %563 = vmatprep.subr.mxu0 0.0
    %564 = vmatpush1.msra.mxu0 %v557
    %565 = vmatprep.subr.mxu0 0.0
    %566 = vmatpush1.msra.mxu0 %v558
    %567 = vmatprep.subr.mxu0 0.0
    %568 = vmatpush1.msra.mxu0 0.0
    %569 = vmatprep.subr.mxu0 0.0
    %570 = vmatpush1.msra.mxu0 0.0
    %571 = vmatprep.subr.mxu0 0.0
    %572 = vmatpush1.msra.mxu0 0.0
    %573 = vmatprep.subr.mxu0 0.0
    %574 = vmatpush1.msra.mxu0 0.0
    %575 = vmatprep.subr.mxu0 0.0
    %576 = vmatpush1.msra.mxu0 0.0
    %577 = vmatprep.subr.mxu0 0.0
    %578 = vmatpush1.msra.mxu0 0.0
    %579 = vmatprep.subr.mxu0 0.0
    %580 = vmatpush1.msra.mxu0 0.0
    %581 = vmatprep.subr.mxu0 0.0
    %582 = vmatpush1.msra.mxu0 0.0
    %583 = vmatprep.subr.mxu0 0.0
    %584 = vmatpush1.msra.mxu0 0.0
    %585 = vmatprep.subr.mxu0 0.0
    %586 = vmatpush1.msra.mxu0 0.0
    %587 = vmatprep.subr.mxu0 0.0
    %588 = vmatpush1.msra.mxu0 0.0
    %589 = vmatprep.subr.mxu0 0.0
    %590 = vmatpush1.msra.mxu0 0.0
    %591 = vmatprep.subr.mxu0 0.0
    %592 = vmatpush1.msra.mxu0 0.0
    %593 = vmatprep.subr.mxu0 0.0
    %594 = vmatpush1.msra.mxu0 0.0
    %595 = vmatprep.subr.mxu0 0.0
    %596 = vmatpush1.msra.mxu0 0.0
    %597 = vmatprep.subr.mxu0 0.0
    %598 = vmatpush1.msra.mxu0 0.0
    %599 = vmatprep.subr.mxu0 0.0
    %600 = vmatpush1.msra.mxu0 0.0
    %601 = vmatprep.subr.mxu0 0.0
    %602 = vmatpush1.msra.mxu0 0.0
    %603 = vmatprep.subr.mxu0 0.0
    %604 = vmatpush1.msra.mxu0 0.0
    %605 = vmatprep.subr.mxu0 0.0
    %606 = vmatpush1.msra.mxu0 0.0
    %607 = vmatprep.subr.mxu0 0.0
    %608 = vmatpush1.msra.mxu0 0.0
    %609 = vmatprep.subr.mxu0 0.0
    %610 = vmatpush1.msra.mxu0 0.0
    %611 = vmatprep.subr.mxu0 0.0
    %612 = vmatpush1.msra.mxu0 0.0
    %613 = vmatprep.subr.mxu0 0.0
    %614 = vmatpush1.msra.mxu0 0.0
    %615 = vmatprep.subr.mxu0 0.0
    %616 = vmatpush1.msra.mxu0 0.0
    %617 = vmatprep.subr.mxu0 0.0
    %618 = vmatpush1.msra.mxu0 0.0
    %619 = vmatprep.subr.mxu0 0.0
    %620 = vmatpush1.msra.mxu0 0.0
    %621 = vmatprep.subr.mxu0 0.0
    %622 = vmatpush1.msra.mxu0 0.0
    %623 = vmatprep.subr.mxu0 0.0
    %624 = vmatpush1.msra.mxu0 0.0
    %625 = vmatprep.subr.mxu0 0.0
    %626 = vmatpush1.msra.mxu0 0.0
    %627 = vmatprep.mubr.f32.mxu0 0.0
    %628 = vmatmul.mubr.f32.gmra.mrb[0].mxu0 %v561
    %v629 = vpop.f32.mrb[0].mxu0
    %v630 = vadd.f32 0.0, %v629
    %v631 = vpop.f32.mrb[0].mxu0
    %632 = vdwg.mxu0
    %633 = vst [vmem:[%s6] sm:$0xff] %v630
    %v634 = vld [vmem:[#allocation7] sm:$0xff]
    %v635 = vld [vmem:[#allocation7 + $0x8] sm:$0xff]
    %v636 = vld [vmem:[#allocation7 + $0x10] sm:$0xff]
    %v637 = vld [vmem:[#allocation7 + $0x18] sm:$0xff]
    %v638 = vld [vmem:[#allocation7 + $0x20] sm:$0xff]
    %v639 = vld [vmem:[#allocation7 + $0x28] sm:$0xff]
    %v640 = vld [vmem:[#allocation7 + $0x30] sm:$0xff]
    %v641 = vld [vmem:[#allocation7 + $0x38] sm:$0xff]
    %v642 = vld [vmem:[#allocation7 + $0x40] sm:$0xff]
    %v643 = vld [vmem:[#allocation7 + $0x48] sm:$0xff]
    %v644 = vld [vmem:[#allocation7 + $0x50] sm:$0xff]
    %v645 = vld [vmem:[#allocation7 + $0x58] sm:$0xff]
    %v646 = vld [vmem:[#allocation7 + $0x60] sm:$0xff]
    %v647 = vld [vmem:[#allocation7 + $0x68] sm:$0xff]
    %v648 = vld [vmem:[#allocation7 + $0x70] sm:$0xff]
    %v649 = vld [vmem:[#allocation7 + $0x78] sm:$0xff]
    %v650 = vld [vmem:[%s5 + $0x3] sm:$0x1]
    %v651 = vlaneseq
    %v652 = vshrl.u32 %v651, 7
    %v653 = vsub.s32 0, %v652
    %v654 = vrot.slane %v650, %v653
    %655 = vmatprep.subr.mxu0 0.0
    %656 = vmatpush1.msra.mxu0 %v634
    %657 = vmatprep.subr.mxu0 0.0
    %658 = vmatpush1.msra.mxu0 %v635
    %659 = vmatprep.subr.mxu0 0.0
    %660 = vmatpush1.msra.mxu0 %v636
    %661 = vmatprep.subr.mxu0 0.0
    %662 = vmatpush1.msra.mxu0 %v637
    %663 = vmatprep.subr.mxu0 0.0
    %664 = vmatpush1.msra.mxu0 %v638
    %665 = vmatprep.subr.mxu0 0.0
    %666 = vmatpush1.msra.mxu0 %v639
    %667 = vmatprep.subr.mxu0 0.0
    %668 = vmatpush1.msra.mxu0 %v640
    %669 = vmatprep.subr.mxu0 0.0
    %670 = vmatpush1.msra.mxu0 %v641
    %671 = vmatprep.subr.mxu0 0.0
    %672 = vmatpush1.msra.mxu0 %v642
    %673 = vmatprep.subr.mxu0 0.0
    %674 = vmatpush1.msra.mxu0 %v643
    %675 = vmatprep.subr.mxu0 0.0
    %676 = vmatpush1.msra.mxu0 %v644
    %677 = vmatprep.subr.mxu0 0.0
    %678 = vmatpush1.msra.mxu0 %v645
    %679 = vmatprep.subr.mxu0 0.0
    %680 = vmatpush1.msra.mxu0 %v646
    %681 = vmatprep.subr.mxu0 0.0
    %682 = vmatpush1.msra.mxu0 %v647
    %683 = vmatprep.subr.mxu0 0.0
    %684 = vmatpush1.msra.mxu0 %v648
    %685 = vmatprep.subr.mxu0 0.0
    %686 = vmatpush1.msra.mxu0 %v649
    %687 = vmatprep.subr.mxu0 0.0
    %688 = vmatpush1.msra.mxu0 0.0
    %689 = vmatprep.subr.mxu0 0.0
    %690 = vmatpush1.msra.mxu0 0.0
    %691 = vmatprep.subr.mxu0 0.0
    %692 = vmatpush1.msra.mxu0 0.0
    %693 = vmatprep.subr.mxu0 0.0
    %694 = vmatpush1.msra.mxu0 0.0
    %695 = vmatprep.subr.mxu0 0.0
    %696 = vmatpush1.msra.mxu0 0.0
    %697 = vmatprep.subr.mxu0 0.0
    %698 = vmatpush1.msra.mxu0 0.0
    %699 = vmatprep.subr.mxu0 0.0
    %700 = vmatpush1.msra.mxu0 0.0
    %701 = vmatprep.subr.mxu0 0.0
    %702 = vmatpush1.msra.mxu0 0.0
    %703 = vmatprep.subr.mxu0 0.0
    %704 = vmatpush1.msra.mxu0 0.0
    %705 = vmatprep.subr.mxu0 0.0
    %706 = vmatpush1.msra.mxu0 0.0
    %707 = vmatprep.subr.mxu0 0.0
    %708 = vmatpush1.msra.mxu0 0.0
    %709 = vmatprep.subr.mxu0 0.0
    %710 = vmatpush1.msra.mxu0 0.0
    %711 = vmatprep.subr.mxu0 0.0
    %712 = vmatpush1.msra.mxu0 0.0
    %713 = vmatprep.subr.mxu0 0.0
    %714 = vmatpush1.msra.mxu0 0.0
    %715 = vmatprep.subr.mxu0 0.0
    %716 = vmatpush1.msra.mxu0 0.0
    %717 = vmatprep.subr.mxu0 0.0
    %718 = vmatpush1.msra.mxu0 0.0
    %719 = vmatprep.mubr.f32.mxu0 0.0
    %720 = vmatmul.mubr.f32.gmra.mrb[0].mxu0 %v630
    %v721 = vpop.f32.mrb[0].mxu0
    %v722 = vadd.f32 %v654, %v721
    %v723 = vpop.f32.mrb[0].mxu0
    %724 = vdwg.mxu0
    %v725 = vmax.f32 %v722, 0.0
    %s726 = scalar_lea.vmem [#allocation7], 128
    %v727 = vld [vmem:[%s726] sm:$0xff]
    %v728 = vld [vmem:[%s726 + $0x8] sm:$0xff]
    %v729 = vld [vmem:[%s726 + $0x10] sm:$0xff]
    %v730 = vld [vmem:[%s726 + $0x18] sm:$0xff]
    %v731 = vld [vmem:[%s726 + $0x20] sm:$0xff]
    %v732 = vld [vmem:[%s726 + $0x28] sm:$0xff]
    %v733 = vld [vmem:[%s726 + $0x30] sm:$0xff]
    %v734 = vld [vmem:[%s726 + $0x38] sm:$0xff]
    %v735 = vld [vmem:[%s726 + $0x40] sm:$0xff]
    %v736 = vld [vmem:[%s726 + $0x48] sm:$0xff]
    %v737 = vld [vmem:[%s726 + $0x50] sm:$0xff]
    %v738 = vld [vmem:[%s726 + $0x58] sm:$0xff]
    %v739 = vld [vmem:[%s726 + $0x60] sm:$0xff]
    %v740 = vld [vmem:[%s726 + $0x68] sm:$0xff]
    %v741 = vld [vmem:[%s726 + $0x70] sm:$0xff]
    %v742 = vld [vmem:[%s726 + $0x78] sm:$0xff]
    %v743 = vld [vmem:[%s5 + $0x4] sm:$0x1]
    %v744 = vlaneseq
    %v745 = vshrl.u32 %v744, 7
    %v746 = vsub.s32 0, %v745
    %v747 = vrot.slane %v743, %v746
    %748 = vmatprep.subr.mxu0 0.0
    %749 = vmatpush1.msra.mxu0 %v727
    %750 = vmatprep.subr.mxu0 0.0
    %751 = vmatpush1.msra.mxu0 %v728
    %752 = vmatprep.subr.mxu0 0.0
    %753 = vmatpush1.msra.mxu0 %v729
    %754 = vmatprep.subr.mxu0 0.0
    %755 = vmatpush1.msra.mxu0 %v730
    %756 = vmatprep.subr.mxu0 0.0
    %757 = vmatpush1.msra.mxu0 %v731
    %758 = vmatprep.subr.mxu0 0.0
    %759 = vmatpush1.msra.mxu0 %v732
    %760 = vmatprep.subr.mxu0 0.0
    %761 = vmatpush1.msra.mxu0 %v733
    %762 = vmatprep.subr.mxu0 0.0
    %763 = vmatpush1.msra.mxu0 %v734
    %764 = vmatprep.subr.mxu0 0.0
    %765 = vmatpush1.msra.mxu0 %v735
    %766 = vmatprep.subr.mxu0 0.0
    %767 = vmatpush1.msra.mxu0 %v736
    %768 = vmatprep.subr.mxu0 0.0
    %769 = vmatpush1.msra.mxu0 %v737
    %770 = vmatprep.subr.mxu0 0.0
    %771 = vmatpush1.msra.mxu0 %v738
    %772 = vmatprep.subr.mxu0 0.0
    %773 = vmatpush1.msra.mxu0 %v739
    %774 = vmatprep.subr.mxu0 0.0
    %775 = vmatpush1.msra.mxu0 %v740
    %776 = vmatprep.subr.mxu0 0.0
    %777 = vmatpush1.msra.mxu0 %v741
    %778 = vmatprep.subr.mxu0 0.0
    %779 = vmatpush1.msra.mxu0 %v742
    %780 = vmatprep.subr.mxu0 0.0
    %781 = vmatpush1.msra.mxu0 0.0
    %782 = vmatprep.subr.mxu0 0.0
    %783 = vmatpush1.msra.mxu0 0.0
    %784 = vmatprep.subr.mxu0 0.0
    %785 = vmatpush1.msra.mxu0 0.0
    %786 = vmatprep.subr.mxu0 0.0
    %787 = vmatpush1.msra.mxu0 0.0
    %788 = vmatprep.subr.mxu0 0.0
    %789 = vmatpush1.msra.mxu0 0.0
    %790 = vmatprep.subr.mxu0 0.0
    %791 = vmatpush1.msra.mxu0 0.0
    %792 = vmatprep.subr.mxu0 0.0
    %793 = vmatpush1.msra.mxu0 0.0
    %794 = vmatprep.subr.mxu0 0.0
    %795 = vmatpush1.msra.mxu0 0.0
    %796 = vmatprep.subr.mxu0 0.0
    %797 = vmatpush1.msra.mxu0 0.0
    %798 = vmatprep.subr.mxu0 0.0
    %799 = vmatpush1.msra.mxu0 0.0
    %800 = vmatprep.subr.mxu0 0.0
    %801 = vmatpush1.msra.mxu0 0.0
    %802 = vmatprep.subr.mxu0 0.0
    %803 = vmatpush1.msra.mxu0 0.0
    %804 = vmatprep.subr.mxu0 0.0
    %805 = vmatpush1.msra.mxu0 0.0
    %806 = vmatprep.subr.mxu0 0.0
    %807 = vmatpush1.msra.mxu0 0.0
    %808 = vmatprep.subr.mxu0 0.0
    %809 = vmatpush1.msra.mxu0 0.0
    %810 = vmatprep.subr.mxu0 0.0
    %811 = vmatpush1.msra.mxu0 0.0
    %812 = vmatprep.mubr.f32.mxu0 0.0
    %813 = vmatmul.mubr.f32.gmra.mrb[0].mxu0 %v725
    %v814 = vpop.f32.mrb[0].mxu0
    %v815 = vadd.f32 %v747, %v814
    %v816 = vpop.f32.mrb[0].mxu0
    %817 = vdwg.mxu0
    %v818 = vmax.f32 %v815, 0.0
    %s819 = scalar_lea.vmem [#allocation7], 256
    %v820 = vld [vmem:[%s819] sm:$0xff]
    %v821 = vld [vmem:[%s819 + $0x8] sm:$0xff]
    %v822 = vld [vmem:[%s819 + $0x10] sm:$0xff]
    %v823 = vld [vmem:[%s819 + $0x18] sm:$0xff]
    %v824 = vld [vmem:[%s819 + $0x20] sm:$0xff]
    %v825 = vld [vmem:[%s819 + $0x28] sm:$0xff]
    %v826 = vld [vmem:[%s819 + $0x30] sm:$0xff]
    %v827 = vld [vmem:[%s819 + $0x38] sm:$0xff]
    %v828 = vld [vmem:[%s819 + $0x40] sm:$0xff]
    %v829 = vld [vmem:[%s819 + $0x48] sm:$0xff]
    %v830 = vld [vmem:[%s819 + $0x50] sm:$0xff]
    %v831 = vld [vmem:[%s819 + $0x58] sm:$0xff]
    %v832 = vld [vmem:[%s819 + $0x60] sm:$0xff]
    %v833 = vld [vmem:[%s819 + $0x68] sm:$0xff]
    %v834 = vld [vmem:[%s819 + $0x70] sm:$0xff]
    %v835 = vld [vmem:[%s819 + $0x78] sm:$0xff]
    %v836 = vld [vmem:[%s5 + $0x5] sm:$0x1]
    %v837 = vlaneseq
    %v838 = vshrl.u32 %v837, 7
    %v839 = vsub.s32 0, %v838
    %v840 = vrot.slane %v836, %v839
    %841 = vmatprep.subr.mxu0 0.0
    %842 = vmatpush1.msra.mxu0 %v820
    %843 = vmatprep.subr.mxu0 0.0
    %844 = vmatpush1.msra.mxu0 %v821
    %845 = vmatprep.subr.mxu0 0.0
    %846 = vmatpush1.msra.mxu0 %v822
    %847 = vmatprep.subr.mxu0 0.0
    %848 = vmatpush1.msra.mxu0 %v823
    %849 = vmatprep.subr.mxu0 0.0
    %850 = vmatpush1.msra.mxu0 %v824
    %851 = vmatprep.subr.mxu0 0.0
    %852 = vmatpush1.msra.mxu0 %v825
    %853 = vmatprep.subr.mxu0 0.0
    %854 = vmatpush1.msra.mxu0 %v826
    %855 = vmatprep.subr.mxu0 0.0
    %856 = vmatpush1.msra.mxu0 %v827
    %857 = vmatprep.subr.mxu0 0.0
    %858 = vmatpush1.msra.mxu0 %v828
    %859 = vmatprep.subr.mxu0 0.0
    %860 = vmatpush1.msra.mxu0 %v829
    %861 = vmatprep.subr.mxu0 0.0
    %862 = vmatpush1.msra.mxu0 %v830
    %863 = vmatprep.subr.mxu0 0.0
    %864 = vmatpush1.msra.mxu0 %v831
    %865 = vmatprep.subr.mxu0 0.0
    %866 = vmatpush1.msra.mxu0 %v832
    %867 = vmatprep.subr.mxu0 0.0
    %868 = vmatpush1.msra.mxu0 %v833
    %869 = vmatprep.subr.mxu0 0.0
    %870 = vmatpush1.msra.mxu0 %v834
    %871 = vmatprep.subr.mxu0 0.0
    %872 = vmatpush1.msra.mxu0 %v835
    %873 = vmatprep.subr.mxu0 0.0
    %874 = vmatpush1.msra.mxu0 0.0
    %875 = vmatprep.subr.mxu0 0.0
    %876 = vmatpush1.msra.mxu0 0.0
    %877 = vmatprep.subr.mxu0 0.0
    %878 = vmatpush1.msra.mxu0 0.0
    %879 = vmatprep.subr.mxu0 0.0
    %880 = vmatpush1.msra.mxu0 0.0
    %881 = vmatprep.subr.mxu0 0.0
    %882 = vmatpush1.msra.mxu0 0.0
    %883 = vmatprep.subr.mxu0 0.0
    %884 = vmatpush1.msra.mxu0 0.0
    %885 = vmatprep.subr.mxu0 0.0
    %886 = vmatpush1.msra.mxu0 0.0
    %887 = vmatprep.subr.mxu0 0.0
    %888 = vmatpush1.msra.mxu0 0.0
    %889 = vmatprep.subr.mxu0 0.0
    %890 = vmatpush1.msra.mxu0 0.0
    %891 = vmatprep.subr.mxu0 0.0
    %892 = vmatpush1.msra.mxu0 0.0
    %893 = vmatprep.subr.mxu0 0.0
    %894 = vmatpush1.msra.mxu0 0.0
    %895 = vmatprep.subr.mxu0 0.0
    %896 = vmatpush1.msra.mxu0 0.0
    %897 = vmatprep.subr.mxu0 0.0
    %898 = vmatpush1.msra.mxu0 0.0
    %899 = vmatprep.subr.mxu0 0.0
    %900 = vmatpush1.msra.mxu0 0.0
    %901 = vmatprep.subr.mxu0 0.0
    %902 = vmatpush1.msra.mxu0 0.0
    %903 = vmatprep.subr.mxu0 0.0
    %904 = vmatpush1.msra.mxu0 0.0
    %905 = vmatprep.mubr.f32.mxu0 0.0
    %906 = vmatmul.mubr.f32.gmra.mrb[0].mxu0 %v818
    %v907 = vpop.f32.mrb[0].mxu0
    %v908 = vadd.f32 %v840, %v907
    %v909 = vpop.f32.mrb[0].mxu0
    %910 = vdwg.mxu0
    %v911 = vmax.f32 %v908, 0.0
    %s912 = scalar_lea.vmem [#allocation7], 384
    %v913 = vld [vmem:[%s912] sm:$0xff]
    %v914 = vld [vmem:[%s912 + $0x8] sm:$0xff]
    %v915 = vld [vmem:[%s912 + $0x10] sm:$0xff]
    %v916 = vld [vmem:[%s912 + $0x18] sm:$0xff]
    %v917 = vld [vmem:[%s912 + $0x20] sm:$0xff]
    %v918 = vld [vmem:[%s912 + $0x28] sm:$0xff]
    %v919 = vld [vmem:[%s912 + $0x30] sm:$0xff]
    %v920 = vld [vmem:[%s912 + $0x38] sm:$0xff]
    %v921 = vld [vmem:[%s912 + $0x40] sm:$0xff]
    %v922 = vld [vmem:[%s912 + $0x48] sm:$0xff]
    %v923 = vld [vmem:[%s912 + $0x50] sm:$0xff]
    %v924 = vld [vmem:[%s912 + $0x58] sm:$0xff]
    %v925 = vld [vmem:[%s912 + $0x60] sm:$0xff]
    %v926 = vld [vmem:[%s912 + $0x68] sm:$0xff]
    %v927 = vld [vmem:[%s912 + $0x70] sm:$0xff]
    %v928 = vld [vmem:[%s912 + $0x78] sm:$0xff]
    %v929 = vld [vmem:[%s5 + $0x6] sm:$0x1]
    %v930 = vlaneseq
    %v931 = vshrl.u32 %v930, 7
    %v932 = vsub.s32 0, %v931
    %v933 = vrot.slane %v929, %v932
    %934 = vmatprep.subr.mxu0 0.0
    %935 = vmatpush1.msra.mxu0 %v913
    %936 = vmatprep.subr.mxu0 0.0
    %937 = vmatpush1.msra.mxu0 %v914
    %938 = vmatprep.subr.mxu0 0.0
    %939 = vmatpush1.msra.mxu0 %v915
    %940 = vmatprep.subr.mxu0 0.0
    %941 = vmatpush1.msra.mxu0 %v916
    %942 = vmatprep.subr.mxu0 0.0
    %943 = vmatpush1.msra.mxu0 %v917
    %944 = vmatprep.subr.mxu0 0.0
    %945 = vmatpush1.msra.mxu0 %v918
    %946 = vmatprep.subr.mxu0 0.0
    %947 = vmatpush1.msra.mxu0 %v919
    %948 = vmatprep.subr.mxu0 0.0
    %949 = vmatpush1.msra.mxu0 %v920
    %950 = vmatprep.subr.mxu0 0.0
    %951 = vmatpush1.msra.mxu0 %v921
    %952 = vmatprep.subr.mxu0 0.0
    %953 = vmatpush1.msra.mxu0 %v922
    %954 = vmatprep.subr.mxu0 0.0
    %955 = vmatpush1.msra.mxu0 %v923
    %956 = vmatprep.subr.mxu0 0.0
    %957 = vmatpush1.msra.mxu0 %v924
    %958 = vmatprep.subr.mxu0 0.0
    %959 = vmatpush1.msra.mxu0 %v925
    %960 = vmatprep.subr.mxu0 0.0
    %961 = vmatpush1.msra.mxu0 %v926
    %962 = vmatprep.subr.mxu0 0.0
    %963 = vmatpush1.msra.mxu0 %v927
    %964 = vmatprep.subr.mxu0 0.0
    %965 = vmatpush1.msra.mxu0 %v928
    %966 = vmatprep.subr.mxu0 0.0
    %967 = vmatpush1.msra.mxu0 0.0
    %968 = vmatprep.subr.mxu0 0.0
    %969 = vmatpush1.msra.mxu0 0.0
    %970 = vmatprep.subr.mxu0 0.0
    %971 = vmatpush1.msra.mxu0 0.0
    %972 = vmatprep.subr.mxu0 0.0
    %973 = vmatpush1.msra.mxu0 0.0
    %974 = vmatprep.subr.mxu0 0.0
    %975 = vmatpush1.msra.mxu0 0.0
    %976 = vmatprep.subr.mxu0 0.0
    %977 = vmatpush1.msra.mxu0 0.0
    %978 = vmatprep.subr.mxu0 0.0
    %979 = vmatpush1.msra.mxu0 0.0
    %980 = vmatprep.subr.mxu0 0.0
    %981 = vmatpush1.msra.mxu0 0.0
    %982 = vmatprep.subr.mxu0 0.0
    %983 = vmatpush1.msra.mxu0 0.0
    %984 = vmatprep.subr.mxu0 0.0
    %985 = vmatpush1.msra.mxu0 0.0
    %986 = vmatprep.subr.mxu0 0.0
    %987 = vmatpush1.msra.mxu0 0.0
    %988 = vmatprep.subr.mxu0 0.0
    %989 = vmatpush1.msra.mxu0 0.0
    %990 = vmatprep.subr.mxu0 0.0
    %991 = vmatpush1.msra.mxu0 0.0
    %992 = vmatprep.subr.mxu0 0.0
    %993 = vmatpush1.msra.mxu0 0.0
    %994 = vmatprep.subr.mxu0 0.0
    %995 = vmatpush1.msra.mxu0 0.0
    %996 = vmatprep.subr.mxu0 0.0
    %997 = vmatpush1.msra.mxu0 0.0
    %998 = vmatprep.mubr.f32.mxu0 0.0
    %999 = vmatmul.mubr.f32.gmra.mrb[0].mxu0 %v911
    %v1000 = vpop.f32.mrb[0].mxu0
    %v1001 = vadd.f32 %v933, %v1000
    %v1002 = vpop.f32.mrb[0].mxu0
    %1003 = vdwg.mxu0
    %1004 = vst [vmem:[%s6 + $0x8] sm:$0xff] %v1001
    // Predicated region
    $region42: #{net_forward.1} parent=1 // pred_check
      _
    $region43: #{net_forward.1} parent=1 // pred_check_branch
      %1006 = sbr.rel (0) target = $region45
    $region44: #{net_forward.1} parent=1 // pred_region
      _
    $region45: #{net_forward.1} parent=1 // pred_fallthru
      _
    // Predicated region
    $region46: #{net_forward.1} parent=1 // pred_check
      _
    $region47: #{net_forward.1} parent=1 // pred_check_branch
      %1008 = sbr.rel (0) target = $region49
    $region48: #{net_forward.1} parent=1 // pred_region
      _
    $region49: #{net_forward.1} parent=1 // pred_fallthru
      _
    %1009 = vsyncpa [#allocation3], 1
    %1010 = vsyncpa [#allocation5], 1
    %1011 = vsyncpa [#allocation8], 1

</llo_original>
